<compile_context>
chip_gen: v7x
topology: tpu7x:2x2x1
jax: 0.10.0
libtpu: 0.0.40
codegen_flags: <defaults>
</compile_context>

<pallas_src>
import jax
import jax.numpy as jnp
from jax.experimental import pallas as pl
from jax.experimental.pallas import tpu as pltpu


def _round_up(x, m):
    return ((x + m - 1) // m) * m


def _vmem_capacity_bytes():
    """Physical VMEM of the current part (128 MiB v5e/v6e, 64 MiB v7x)."""
    try:
        cap = getattr(pltpu.get_tpu_info(), "vmem_capacity_bytes", None)
        if cap:
            return int(cap)
    except Exception:
        pass
    return 64 << 20  # conservative (v7x-sized) fallback


def _choose_block_rows(b, max_block_rows):
    """Row tile: multiple of 16 (bf16 sublane packing), never larger than the
    array, and small enough that the grid has >=2 steps when possible so both
    v7x TensorCores get work under dimension_semantics=('parallel',)."""
    if b < 16:
        return b  # single full-extent block (block dims == array dims is always legal)
    rows = _round_up(pl.cdiv(b, 2), 16)
    rows = min(rows, max_block_rows, (b // 16) * 16)
    return max(rows, 16)


def _itm_ffn_kernel(cls_ref, start_ref, w1_ref, b1_ref, w2_ref, b2_ref, out_ref):
    # Elementwise fuse in f32 on the VPU (v5e has no bf16 VALU path); activations
    # arrive in bf16 (halved HBM read traffic) and are upcast once inside VMEM.
    fused = cls_ref[...].astype(jnp.float32) * start_ref[...].astype(jnp.float32)
    # Linear 1 on the MXU: bf16 operands, f32 accumulate.
    h = jnp.dot(fused.astype(jnp.bfloat16), w1_ref[...],
                preferred_element_type=jnp.float32)
    h = jnp.maximum(h + b1_ref[...], 0.0)                       # (R, H2p) f32, ReLU
    # Linear 2 (H/2 -> 1): VPU multiply + XLU lane reduction — MXU/VPU have slack,
    # the kernel is DMA-bound, so this is free filler.
    logits = jnp.sum(h * w2_ref[...], axis=-1, keepdims=True) + b2_ref[0, 0]
    out_ref[...] = 1.0 / (1.0 + jnp.exp(-logits))               # sigmoid, (R, 1) f32


def itm_ffn_pallas(cls_act, start_act, w1_bf16, b1_row, w2_row, b2,
                   *, max_block_rows=None):
    """sigmoid(FFN(cls_act * start_act)) applied row-wise; returns (B,) float32.
    Weights come pre-prepared by prepare_itm_params (bf16 w1, h2 padded to a
    multiple of 128, w2 as a (1, H2p) lane row, b2 as a (1, 1) SMEM scalar)."""
    b, hdim = cls_act.shape
    h2p = w1_bf16.shape[1]

    cap = _vmem_capacity_bytes()
    if max_block_rows is None:
        # 128 MiB parts (v5e/v6e) can afford 1024-row tiles; 64 MiB (v7x) gets 512.
        max_block_rows = 1024 if cap >= (96 << 20) else 512

    block_rows = _choose_block_rows(b, max_block_rows)
    num_tiles = pl.cdiv(b, block_rows)   # partial last block is masked by Pallas

    # Explicit scoped-VMEM budget: double-buffered activation tiles + (worst case)
    # double-buffered weights + lane/sublane-padded bias/output tiles + slack,
    # clamped below physical VMEM with headroom for compiler-internal scratch.
    act_bytes = jnp.dtype(cls_act.dtype).itemsize
    w1_bytes = jnp.dtype(w1_bf16.dtype).itemsize
    needed = (
        2 * 2 * block_rows * hdim * act_bytes      # cls + start tiles, 2 buffers each
        + 2 * hdim * h2p * w1_bytes                # w1 (upper bound: 2 buffers)
        + 2 * 2 * 8 * max(h2p, 128) * 4            # b1 / w2 rows (sublane+lane padded)
        + 2 * block_rows * 128 * 4                 # (R, 1) output tile (lane padded)
    )
    vmem_limit = int(min(max(needed + (8 << 20), 32 << 20), cap - (8 << 20)))

    def build_and_call(single_buffer_weights):
        # Resident weights never change block index; single-buffer them so a big
        # bf16 w1 is not duplicated in VMEM (matters on v7x's 64 MiB VMEM).
        wkw = dict(pipeline_mode=pl.Buffered(1)) if single_buffer_weights else {}
        return pl.pallas_call(
            _itm_ffn_kernel,
            out_shape=jax.ShapeDtypeStruct((b, 1), jnp.float32),
            grid=(num_tiles,),
            in_specs=[
                pl.BlockSpec((block_rows, hdim), lambda i: (i, 0)),   # cls tile (bf16)
                pl.BlockSpec((block_rows, hdim), lambda i: (i, 0)),   # start tile (bf16)
                pl.BlockSpec((hdim, h2p), lambda i: (0, 0), **wkw),   # w1 resident (bf16)
                pl.BlockSpec((1, h2p), lambda i: (0, 0), **wkw),      # b1 row (f32)
                pl.BlockSpec((1, h2p), lambda i: (0, 0), **wkw),      # w2 row (f32)
                pl.BlockSpec(memory_space=pltpu.MemorySpace.SMEM),    # b2 scalar
            ],
            out_specs=pl.BlockSpec((block_rows, 1), lambda i: (i, 0)),
            compiler_params=pltpu.CompilerParams(
                dimension_semantics=("parallel",),   # row tiles shard across TCs (v7x)
                vmem_limit_bytes=vmem_limit,
            ),
        )(cls_act, start_act, w1_bf16, b1_row, w2_row, b2)

    try:
        out = build_and_call(True)
    except Exception:
        # pipeline_mode=pl.Buffered(1) unavailable on this jax version: fall back
        # to default double-buffered weights (identical results, more VMEM).
        out = build_and_call(False)
    return out[:b, 0]


def prepare_itm_params(params):
    """One-time, hoisted out of the per-call forward (perf review item):
    cast w1 to bf16 once, zero-pad h2 = H//2 up to a multiple of 128 (exact:
    padded ReLU columns are 0 and their w2 weights are 0), reshape w2 into a
    (1, H2p) lane row, keep b2 as a (1, 1) SMEM scalar."""
    w1 = params["w1"]                       # (H, H2) f32, stored transposed vs torch
    b1 = params["b1"].reshape(1, -1)
    w2 = params["w2"].reshape(1, -1)
    b2 = params["b2"].reshape(1, 1)
    h2 = w1.shape[1]
    h2p = _round_up(h2, 128)
    if h2p != h2:
        w1 = jnp.pad(w1, ((0, 0), (0, h2p - h2)))
        b1 = jnp.pad(b1, ((0, 0), (0, h2p - h2)))
        w2 = jnp.pad(w2, ((0, 0), (0, h2p - h2)))
    return {
        "w1": w1.astype(jnp.bfloat16),
        "b1": b1.astype(jnp.float32),
        "w2": w2.astype(jnp.float32),
        "b2": b2.astype(jnp.float32),
    }


def itm_head_forward(prepared_params, cls_token, start_token, similarity_matrix, key):
    """Full ITMHead.forward. similarity_matrix is accepted but unused (as in PyTorch)."""
    del similarity_matrix
    batch_size = cls_token.shape[0]

    # Hard-negative index sampling (torch.randint + self-exclusion `where`, as in
    # the PyTorch module). Same distribution/semantics; RNG stream differs.
    hni = jax.random.randint(key, (batch_size, 1), 0, batch_size)
    own = jnp.arange(batch_size).reshape(-1, 1)
    hni = jnp.where(hni == own, (hni + 1) % batch_size, hni).reshape(-1)

    # negative_features = (cls[hni] * start[hni]) = (cls * start)[hni] and the FFN
    # is row-wise, so negative logits are a gather of the positive logits: run the
    # kernel on the B positive rows only and gather the tiny (B,) result.
    # bf16 activations halve the kernel's dominant HBM read; in a real model the
    # upstream layer should emit bf16 directly so this cast fuses away.
    cls_bf16 = cls_token.astype(jnp.bfloat16)
    start_bf16 = start_token.astype(jnp.bfloat16)
    pos_logits = itm_ffn_pallas(
        cls_bf16, start_bf16,
        prepared_params["w1"], prepared_params["b1"],
        prepared_params["w2"], prepared_params["b2"],
    )                                                              # (B,) f32
    logits = jnp.concatenate([pos_logits, pos_logits[hni]], axis=0)  # (2B,)

    gt_labels = jnp.concatenate(
        [jnp.ones((batch_size,), jnp.float32), jnp.zeros((batch_size,), jnp.float32)]
    )
    return logits, gt_labels


def init_params(key, hidden_size):
    """Deterministic init matching nn.Linear shapes (stored transposed: (in, out))."""
    h2 = hidden_size // 2
    k1, k2, k3, k4 = jax.random.split(key, 4)
    lim1 = 1.0 / jnp.sqrt(hidden_size)
    lim2 = 1.0 / jnp.sqrt(h2)
    return {
        "w1": jax.random.uniform(k1, (hidden_size, h2), jnp.float32, -lim1, lim1),
        "b1": jax.random.uniform(k2, (1, h2), jnp.float32, -lim1, lim1),
        "w2": jax.random.uniform(k3, (h2, 1), jnp.float32, -lim2, lim2),
        "b2": jax.random.uniform(k4, (1, 1), jnp.float32, -lim2, lim2),
    }


if __name__ == "__main__":
    batch_size = 2
    hidden_size = 32

    root = jax.random.PRNGKey(0)
    k_params, k_cls, k_start, k_neg = jax.random.split(root, 4)

    raw_params = init_params(k_params, hidden_size)
    params = prepare_itm_params(raw_params)          # one-time, hoisted out of forward

    cls_token = jax.random.normal(k_cls, (batch_size, hidden_size), jnp.float32)
    start_token = jax.random.normal(k_start, (batch_size, hidden_size), jnp.float32)
    similarity_matrix = jax.random.normal(root, (batch_size, batch_size), jnp.float32)

    logits, gt_labels = itm_head_forward(
        params, cls_token, start_token, similarity_matrix, k_neg
    )
    logits = jax.block_until_ready(logits)
    gt_labels = jax.block_until_ready(gt_labels)

    # sanity checks against a pure-f32 JAX reference of the full original path
    assert logits.shape == (2 * batch_size,)
    assert gt_labels.shape == (2 * batch_size,)

    hni = jax.random.randint(k_neg, (batch_size, 1), 0, batch_size)
    own = jnp.arange(batch_size).reshape(-1, 1)
    hni = jnp.where(hni == own, (hni + 1) % batch_size, hni).reshape(-1)
    fused = jnp.concatenate(
        [cls_token * start_token, cls_token[hni] * start_token[hni]], axis=0
    )
    ref_h = jnp.maximum(fused @ raw_params["w1"] + raw_params["b1"], 0.0)
    ref_logit = ref_h @ raw_params["w2"] + raw_params["b2"]
    ref = (1.0 / (1.0 + jnp.exp(-ref_logit)))[:, 0]

    # bf16 activations + bf16 MXU matmul vs f32 reference: tolerance on sigmoids.
    assert jnp.allclose(logits, ref, atol=2e-2, rtol=2e-2)
    assert jnp.allclose(gt_labels[:batch_size], 1.0)
    assert jnp.allclose(gt_labels[batch_size:], 0.0)

    print("KERNEL_OK")
</pallas_src>

<mosaic_0001>
module attributes {stable_mosaic.version = 11 : i64} {
  func.func @_itm_ffn_kernel(%arg0: i32, %arg1: memref<2x32xbf16, #tpu.memory_space<vmem>>, %arg2: memref<2x32xbf16, #tpu.memory_space<vmem>>, %arg3: memref<32x128xbf16, #tpu.memory_space<vmem>>, %arg4: memref<1x128xf32, #tpu.memory_space<vmem>>, %arg5: memref<1x128xf32, #tpu.memory_space<vmem>>, %arg6: memref<1x1xf32, #tpu.memory_space<smem>>, %arg7: memref<2x1xf32, #tpu.memory_space<vmem>>) attributes {dimension_semantics = [#tpu.dimension_semantics<parallel>], iteration_bounds = array<i64: 1>, scalar_prefetch = 0 : i64, scratch_operands = 0 : i64, tpu.core_type = #tpu.core_type<tc>, window_params = [{transform_indices = @transform_0, window_bounds = array<i64: 2, 32>}, {transform_indices = @transform_1, window_bounds = array<i64: 2, 32>}, {pipeline_mode = #tpu.pipeline_mode<synchronous>, transform_indices = @transform_2, window_bounds = array<i64: 32, 128>}, {pipeline_mode = #tpu.pipeline_mode<synchronous>, transform_indices = @transform_3, window_bounds = array<i64: 1, 128>}, {pipeline_mode = #tpu.pipeline_mode<synchronous>, transform_indices = @transform_4, window_bounds = array<i64: 1, 128>}, {transform_indices = @transform_5, window_bounds = array<i64: 1, 1>}, {transform_indices = @transform_6, window_bounds = array<i64: 2, 1>}]} {
    %c0 = arith.constant 0 : index
    %c0_0 = arith.constant 0 : index
    %0 = vector.load %arg1[%c0, %c0_0] : memref<2x32xbf16, #tpu.memory_space<vmem>>, vector<2x32xbf16>
    %1 = arith.extf %0 : vector<2x32xbf16> to vector<2x32xf32>
    %c0_1 = arith.constant 0 : index
    %c0_2 = arith.constant 0 : index
    %2 = vector.load %arg2[%c0_1, %c0_2] : memref<2x32xbf16, #tpu.memory_space<vmem>>, vector<2x32xbf16>
    %3 = arith.extf %2 : vector<2x32xbf16> to vector<2x32xf32>
    %4 = arith.mulf %1, %3 : vector<2x32xf32>
    %5 = arith.truncf %4 : vector<2x32xf32> to vector<2x32xbf16>
    %c0_3 = arith.constant 0 : index
    %c0_4 = arith.constant 0 : index
    %6 = vector.load %arg3[%c0_3, %c0_4] : memref<32x128xbf16, #tpu.memory_space<vmem>>, vector<32x128xbf16>
    %cst = arith.constant dense<0.000000e+00> : vector<2x128xf32>
    %7 = tpu.matmul %5, %6, %cst {dimension_numbers = #tpu.dot_dimension_numbers<[1], [0], [0], [1], [0, 0, 1, 1], [], []>} : vector<2x32xbf16>, vector<32x128xbf16>, vector<2x128xf32> -> vector<2x128xf32>
    %c0_5 = arith.constant 0 : index
    %c0_6 = arith.constant 0 : index
    %8 = vector.load %arg4[%c0_5, %c0_6] : memref<1x128xf32, #tpu.memory_space<vmem>>, vector<1x128xf32>
    %9 = vector.broadcast %8 : vector<1x128xf32> to vector<2x128xf32>
    %10 = arith.addf %7, %9 : vector<2x128xf32>
    %cst_7 = arith.constant 0.000000e+00 : f32
    %11 = vector.broadcast %cst_7 : f32 to vector<2x128xf32>
    %12 = arith.maximumf %10, %11 : vector<2x128xf32>
    %c0_8 = arith.constant 0 : index
    %c0_9 = arith.constant 0 : index
    %13 = vector.load %arg5[%c0_8, %c0_9] : memref<1x128xf32, #tpu.memory_space<vmem>>, vector<1x128xf32>
    %14 = vector.broadcast %13 : vector<1x128xf32> to vector<2x128xf32>
    %15 = arith.mulf %12, %14 : vector<2x128xf32>
    %cst_10 = arith.constant dense<0.000000e+00> : vector<2xf32>
    %16 = vector.multi_reduction <add>, %15, %cst_10 [1] : vector<2x128xf32> to vector<2xf32>
    %17 = vector.shape_cast %16 : vector<2xf32> to vector<2x1xf32>
    %c0_11 = arith.constant 0 : index
    %c0_12 = arith.constant 0 : index
    %18 = memref.load %arg6[%c0_11, %c0_12] : memref<1x1xf32, #tpu.memory_space<smem>>
    %19 = vector.broadcast %18 : f32 to vector<2x1xf32>
    %20 = arith.addf %17, %19 : vector<2x1xf32>
    %cst_13 = arith.constant 0.000000e+00 : f32
    %21 = vector.broadcast %cst_13 : f32 to vector<2x1xf32>
    %22 = arith.subf %21, %20 : vector<2x1xf32>
    %23 = math.exp %22 : vector<2x1xf32>
    %cst_14 = arith.constant 1.000000e+00 : f32
    %24 = vector.broadcast %cst_14 : f32 to vector<2x1xf32>
    %25 = arith.addf %24, %23 : vector<2x1xf32>
    %cst_15 = arith.constant 1.000000e+00 : f32
    %26 = vector.broadcast %cst_15 : f32 to vector<2x1xf32>
    %27 = arith.divf %26, %25 : vector<2x1xf32>
    %c0_16 = arith.constant 0 : index
    %c0_17 = arith.constant 0 : index
    %28 = vector.load %arg7[%c0_16, %c0_17] : memref<2x1xf32, #tpu.memory_space<vmem>>, vector<2x1xf32>
    tpu.vector_store %arg7[%c0_16, %c0_17], %27 {strides = array<i32>} : memref<2x1xf32, #tpu.memory_space<vmem>>, vector<2x1xf32>,
    return
  }
  func.func @transform_0(%arg0: i32) -> (i32, i32) {
    %c0_i32 = arith.constant 0 : i32
    %c0_i32_0 = arith.constant 0 : i32
    return %arg0, %c0_i32 : i32, i32
  }
  func.func @transform_1(%arg0: i32) -> (i32, i32) {
    %c0_i32 = arith.constant 0 : i32
    %c0_i32_0 = arith.constant 0 : i32
    return %arg0, %c0_i32 : i32, i32
  }
  func.func @transform_2(%arg0: i32) -> (i32, i32) {
    %c0_i32 = arith.constant 0 : i32
    %c0_i32_0 = arith.constant 0 : i32
    %c0_i32_1 = arith.constant 0 : i32
    return %c0_i32, %c0_i32_0 : i32, i32
  }
  func.func @transform_3(%arg0: i32) -> (i32, i32) {
    %c0_i32 = arith.constant 0 : i32
    %c0_i32_0 = arith.constant 0 : i32
    %c0_i32_1 = arith.constant 0 : i32
    return %c0_i32, %c0_i32_0 : i32, i32
  }
  func.func @transform_4(%arg0: i32) -> (i32, i32) {
    %c0_i32 = arith.constant 0 : i32
    %c0_i32_0 = arith.constant 0 : i32
    %c0_i32_1 = arith.constant 0 : i32
    return %c0_i32, %c0_i32_0 : i32, i32
  }
  func.func @transform_5(%arg0: i32) -> (i32, i32) {
    %c0_i32 = arith.constant 0 : i32
    %c0_i32_0 = arith.constant 0 : i32
    %c0_i32_1 = arith.constant 0 : i32
    return %c0_i32, %c0_i32_0 : i32, i32
  }
  func.func @transform_6(%arg0: i32) -> (i32, i32) {
    %c0_i32 = arith.constant 0 : i32
    %c0_i32_0 = arith.constant 0 : i32
    return %arg0, %c0_i32 : i32, i32
  }
}

module attributes {stable_mosaic.version = 11 : i64} {
  func.func @_itm_ffn_kernel(%arg0: i32, %arg1: memref<2x32xbf16, #tpu.memory_space<vmem>>, %arg2: memref<2x32xbf16, #tpu.memory_space<vmem>>, %arg3: memref<32x128xbf16, #tpu.memory_space<vmem>>, %arg4: memref<1x128xf32, #tpu.memory_space<vmem>>, %arg5: memref<1x128xf32, #tpu.memory_space<vmem>>, %arg6: memref<1x1xf32, #tpu.memory_space<smem>>, %arg7: memref<2x1xf32, #tpu.memory_space<vmem>>) attributes {dimension_semantics = [#tpu.dimension_semantics<parallel>], iteration_bounds = array<i64: 1>, scalar_prefetch = 0 : i64, scratch_operands = 0 : i64, tpu.core_type = #tpu.core_type<tc>, window_params = [{transform_indices = @transform_0, window_bounds = array<i64: 2, 32>}, {transform_indices = @transform_1, window_bounds = array<i64: 2, 32>}, {pipeline_mode = #tpu.pipeline_mode<synchronous>, transform_indices = @transform_2, window_bounds = array<i64: 32, 128>}, {pipeline_mode = #tpu.pipeline_mode<synchronous>, transform_indices = @transform_3, window_bounds = array<i64: 1, 128>}, {pipeline_mode = #tpu.pipeline_mode<synchronous>, transform_indices = @transform_4, window_bounds = array<i64: 1, 128>}, {transform_indices = @transform_5, window_bounds = array<i64: 1, 1>}, {transform_indices = @transform_6, window_bounds = array<i64: 2, 1>}]} {
    %c0 = arith.constant 0 : index
    %c0_0 = arith.constant 0 : index
    %0 = vector.load %arg1[%c0, %c0_0] : memref<2x32xbf16, #tpu.memory_space<vmem>>, vector<2x32xbf16>
    %1 = arith.extf %0 : vector<2x32xbf16> to vector<2x32xf32>
    %c0_1 = arith.constant 0 : index
    %c0_2 = arith.constant 0 : index
    %2 = vector.load %arg2[%c0_1, %c0_2] : memref<2x32xbf16, #tpu.memory_space<vmem>>, vector<2x32xbf16>
    %3 = arith.extf %2 : vector<2x32xbf16> to vector<2x32xf32>
    %4 = arith.mulf %1, %3 : vector<2x32xf32>
    %5 = arith.truncf %4 : vector<2x32xf32> to vector<2x32xbf16>
    %c0_3 = arith.constant 0 : index
    %c0_4 = arith.constant 0 : index
    %6 = vector.load %arg3[%c0_3, %c0_4] : memref<32x128xbf16, #tpu.memory_space<vmem>>, vector<32x128xbf16>
    %cst = arith.constant dense<0.000000e+00> : vector<2x128xf32>
    %7 = tpu.matmul %5, %6, %cst {dimension_numbers = #tpu.dot_dimension_numbers<[1], [0], [0], [1], [0, 0, 1, 1], [], []>} : vector<2x32xbf16>, vector<32x128xbf16>, vector<2x128xf32> -> vector<2x128xf32>
    %c0_5 = arith.constant 0 : index
    %c0_6 = arith.constant 0 : index
    %8 = vector.load %arg4[%c0_5, %c0_6] : memref<1x128xf32, #tpu.memory_space<vmem>>, vector<1x128xf32>
    %9 = vector.broadcast %8 : vector<1x128xf32> to vector<2x128xf32>
    %10 = arith.addf %7, %9 : vector<2x128xf32>
    %cst_7 = arith.constant 0.000000e+00 : f32
    %11 = vector.broadcast %cst_7 : f32 to vector<2x128xf32>
    %12 = arith.maximumf %10, %11 : vector<2x128xf32>
    %c0_8 = arith.constant 0 : index
    %c0_9 = arith.constant 0 : index
    %13 = vector.load %arg5[%c0_8, %c0_9] : memref<1x128xf32, #tpu.memory_space<vmem>>, vector<1x128xf32>
    %14 = vector.broadcast %13 : vector<1x128xf32> to vector<2x128xf32>
    %15 = arith.mulf %12, %14 : vector<2x128xf32>
    %cst_10 = arith.constant dense<0.000000e+00> : vector<2xf32>
    %16 = vector.multi_reduction <add>, %15, %cst_10 [1] : vector<2x128xf32> to vector<2xf32>
    %17 = vector.shape_cast %16 : vector<2xf32> to vector<2x1xf32>
    %c0_11 = arith.constant 0 : index
    %c0_12 = arith.constant 0 : index
    %18 = memref.load %arg6[%c0_11, %c0_12] : memref<1x1xf32, #tpu.memory_space<smem>>
    %19 = vector.broadcast %18 : f32 to vector<2x1xf32>
    %20 = arith.addf %17, %19 : vector<2x1xf32>
    %cst_13 = arith.constant 0.000000e+00 : f32
    %21 = vector.broadcast %cst_13 : f32 to vector<2x1xf32>
    %22 = arith.subf %21, %20 : vector<2x1xf32>
    %23 = math.exp %22 : vector<2x1xf32>
    %cst_14 = arith.constant 1.000000e+00 : f32
    %24 = vector.broadcast %cst_14 : f32 to vector<2x1xf32>
    %25 = arith.addf %24, %23 : vector<2x1xf32>
    %cst_15 = arith.constant 1.000000e+00 : f32
    %26 = vector.broadcast %cst_15 : f32 to vector<2x1xf32>
    %27 = arith.divf %26, %25 : vector<2x1xf32>
    %c0_16 = arith.constant 0 : index
    %c0_17 = arith.constant 0 : index
    %28 = vector.load %arg7[%c0_16, %c0_17] : memref<2x1xf32, #tpu.memory_space<vmem>>, vector<2x1xf32>
    tpu.vector_store %arg7[%c0_16, %c0_17], %27 {strides = array<i32>} : memref<2x1xf32, #tpu.memory_space<vmem>>, vector<2x1xf32>,
    return
  }
  func.func @transform_0(%arg0: i32) -> (i32, i32) {
    %c0_i32 = arith.constant 0 : i32
    %c0_i32_0 = arith.constant 0 : i32
    return %arg0, %c0_i32 : i32, i32
  }
  func.func @transform_1(%arg0: i32) -> (i32, i32) {
    %c0_i32 = arith.constant 0 : i32
    %c0_i32_0 = arith.constant 0 : i32
    return %arg0, %c0_i32 : i32, i32
  }
  func.func @transform_2(%arg0: i32) -> (i32, i32) {
    %c0_i32 = arith.constant 0 : i32
    %c0_i32_0 = arith.constant 0 : i32
    %c0_i32_1 = arith.constant 0 : i32
    return %c0_i32, %c0_i32_0 : i32, i32
  }
  func.func @transform_3(%arg0: i32) -> (i32, i32) {
    %c0_i32 = arith.constant 0 : i32
    %c0_i32_0 = arith.constant 0 : i32
    %c0_i32_1 = arith.constant 0 : i32
    return %c0_i32, %c0_i32_0 : i32, i32
  }
  func.func @transform_4(%arg0: i32) -> (i32, i32) {
    %c0_i32 = arith.constant 0 : i32
    %c0_i32_0 = arith.constant 0 : i32
    %c0_i32_1 = arith.constant 0 : i32
    return %c0_i32, %c0_i32_0 : i32, i32
  }
  func.func @transform_5(%arg0: i32) -> (i32, i32) {
    %c0_i32 = arith.constant 0 : i32
    %c0_i32_0 = arith.constant 0 : i32
    %c0_i32_1 = arith.constant 0 : i32
    return %c0_i32, %c0_i32_0 : i32, i32
  }
  func.func @transform_6(%arg0: i32) -> (i32, i32) {
    %c0_i32 = arith.constant 0 : i32
    %c0_i32_0 = arith.constant 0 : i32
    return %arg0, %c0_i32 : i32, i32
  }
}

</mosaic_0001>

<llo_original>
// kernel: tpu_custom_call.1
$region0: #{tpu_custom_call.1}
  #allocation0 [shape = 'u32[]', space=smem, size = 0x4, offset = 0x4, fixed_abs, tag = 'smem constant byte address 0x4 - core index']
  #allocation1 [shape = 'u32[144,128]{1,0:T(1,128)}', space=vmem, size = 0x12000, scoped, tag = 'internal scratch']
  #allocation2 [shape = 'f32[1,1]{1,0:T(1,128)S(6)}', space=smem, size = 0x200, scoped, tag = 'scoped memory for tpu_custom_call.1']
  %s0 = inlined_call_operand.vmem [shape: bf16[2,32], index: 0, kind: input, shape index: {}]
  %s1 = inlined_call_operand.vmem [shape: bf16[2,32], index: 1, kind: input, shape index: {}]
  %s2 = inlined_call_operand.hbm [shape: bf16[32,128], index: 2, kind: input, shape index: {}]
  %s3 = inlined_call_operand.vmem [shape: f32[1,128], index: 3, kind: input, shape index: {}]
  %s4 = inlined_call_operand.vmem [shape: f32[1,128], index: 4, kind: input, shape index: {}]
  %s5 = inlined_call_operand.<no memory space> [shape: f32[1,1], index: 5, kind: input, shape index: {}]
  %s6 = inlined_call_operand.vmem [shape: f32[2,1], index: 6, kind: output, shape index: {}]
  %s7 = sld [smem:[#allocation0]]
  $region38: #{tpu_custom_call.1} parent=0
    _
  %s9 = ssub.s32 1, %s7
  %s10 = scalar_select 0, %s9, %s7
  %11 = sst [smem:[#allocation2]] %s5
  $region1: #{tpu_custom_call.1} parent=0
    #allocation3 [shape = 'u8[8192]{0}', space=vmem, size = 0x2000, scoped, tag = 'input window, operand 2, single buffered']
    #allocation4 [shape = 's32[1]{0}', space=sflag, size = 0x4, scoped, tag = 'scoped memory for tpu_custom_call.1']
    %12 = vsyncpa [#allocation4], 0
    // Predicated region
    $region2: #{tpu_custom_call.1} parent=1 // pred_check
      _
    $region3: #{tpu_custom_call.1} parent=1 // pred_check_branch
      %14 = sbr.rel (0) target = $region5
    $region4: #{tpu_custom_call.1} parent=1 // pred_region
      _
    $region5: #{tpu_custom_call.1} parent=1 // pred_fallthru
      _
    // Predicated region
    $region6: #{tpu_custom_call.1} parent=1 // pred_check
      _
    $region7: #{tpu_custom_call.1} parent=1 // pred_check_branch
      %16 = sbr.rel (0) target = $region9
    $region8: #{tpu_custom_call.1} parent=1 // pred_region
      _
    $region9: #{tpu_custom_call.1} parent=1 // pred_fallthru
      _
    // Predicated region
    $region10: #{tpu_custom_call.1} parent=1 // pred_check
      _
    $region11: #{tpu_custom_call.1} parent=1 // pred_check_branch
      %18 = sbr.rel (0) target = $region13
    $region12: #{tpu_custom_call.1} parent=1 // pred_region
      %s20 = ssub.s32 256, 256
      %21 = vsyncadd [#allocation4], %s20
      %s22 = sshll.u32 [#allocation3], 4
      %s23 = int_to_ptr.vmem [resolvable:$true] %s22
      %28 = dma.hbm_to_vmem [thread:$0]  %s2, 256, %s23, [#allocation4], 64, 64, 4
    $region13: #{tpu_custom_call.1} parent=1 // pred_fallthru
      _
    // Predicated region
    $region14: #{tpu_custom_call.1} parent=1 // pred_check
      _
    $region15: #{tpu_custom_call.1} parent=1 // pred_check_branch
      %30 = sbr.rel (0) target = $region17
    $region16: #{tpu_custom_call.1} parent=1 // pred_region
      _
    $region17: #{tpu_custom_call.1} parent=1 // pred_fallthru
      _
    // Predicated region
    $region18: #{tpu_custom_call.1} parent=1 // pred_check
      _
    $region19: #{tpu_custom_call.1} parent=1 // pred_check_branch
      %32 = sbr.rel (0) target = $region21
    $region20: #{tpu_custom_call.1} parent=1 // pred_region
      _
    $region21: #{tpu_custom_call.1} parent=1 // pred_fallthru
      _
    // Predicated region
    $region22: #{tpu_custom_call.1} parent=1 // pred_check
      _
    $region23: #{tpu_custom_call.1} parent=1 // pred_check_branch
      %34 = sbr.rel (0) target = $region25
    $region24: #{tpu_custom_call.1} parent=1 // pred_region
      _
    $region25: #{tpu_custom_call.1} parent=1 // pred_fallthru
      _
    // Predicated region
    $region26: #{tpu_custom_call.1} parent=1 // pred_check
      _
    $region27: #{tpu_custom_call.1} parent=1 // pred_check_branch
      %36 = sbr.rel (0) target = $region29
    $region28: #{tpu_custom_call.1} parent=1 // pred_region
      %37 = dma.done [#allocation4], 256
    $region29: #{tpu_custom_call.1} parent=1 // pred_fallthru
      _
    %v39 = vld [vmem:[%s0] sm:$0x1]
    %v40 = vunpack.c.l.bf16 %v39
    %v41 = vld [vmem:[%s1] sm:$0x1]
    %v42 = vunpack.c.l.bf16 %v41
    %v43 = vmul.f32 %v40, %v42
    %v44 = vpack.c.bf16 %v43, %v43
    %v45 = vld [vmem:[#allocation3] sm:$0xf]
    %v46 = vld [vmem:[#allocation3 + $0x4] sm:$0xf]
    %v47 = vld [vmem:[#allocation3 + $0x8] sm:$0xf]
    %v48 = vld [vmem:[#allocation3 + $0xc] sm:$0xf]
    %v49 = vld [vmem:[%s3] sm:$0x1]
    %v51 = vlaneseq
    %v52 = vshrl.u32 %v51, 7
    %v53 = vsub.s32 0, %v52
    %v54 = vrot.slane %v49, %v53
    %v60 = vunpack.c.l.b16 %v45
    %v61 = vunpack.c.l.b16 %v46
    %v62 = vunpack.c.l.b16 %v47
    %v63 = vunpack.c.l.b16 %v48
    %v64 = vpack.c.b16 %v61, %v60
    %v65 = vpack.c.b16 %v63, %v62
    %vm68 = vcmask 261120
    %v70 = vsel %vm68, %v44, 0
    %72 = vmatprep.subr.bf16.mxu0 0
    %73 = vmatpush1.bf16.msra.mxu0 %v64
    %74 = vmatprep.subr.bf16.mxu0 0
    %75 = vmatpush1.bf16.msra.mxu0 %v65
    %76 = vmatprep.subr.bf16.mxu0 0
    %77 = vmatpush1.bf16.msra.mxu0 0
    %78 = vmatprep.subr.bf16.mxu0 0
    %79 = vmatpush1.bf16.msra.mxu0 0
    %80 = vmatprep.subr.bf16.mxu0 0
    %81 = vmatpush1.bf16.msra.mxu0 0
    %82 = vmatprep.subr.bf16.mxu0 0
    %83 = vmatpush1.bf16.msra.mxu0 0
    %84 = vmatprep.subr.bf16.mxu0 0
    %85 = vmatpush1.bf16.msra.mxu0 0
    %86 = vmatprep.subr.bf16.mxu0 0
    %87 = vmatpush1.bf16.msra.mxu0 0
    %88 = vmatprep.subr.bf16.mxu0 0
    %89 = vmatpush1.bf16.msra.mxu0 0
    %90 = vmatprep.subr.bf16.mxu0 0
    %91 = vmatpush1.bf16.msra.mxu0 0
    %92 = vmatprep.subr.bf16.mxu0 0
    %93 = vmatpush1.bf16.msra.mxu0 0
    %94 = vmatprep.subr.bf16.mxu0 0
    %95 = vmatpush1.bf16.msra.mxu0 0
    %96 = vmatprep.subr.bf16.mxu0 0
    %97 = vmatpush1.bf16.msra.mxu0 0
    %98 = vmatprep.subr.bf16.mxu0 0
    %99 = vmatpush1.bf16.msra.mxu0 0
    %100 = vmatprep.subr.bf16.mxu0 0
    %101 = vmatpush1.bf16.msra.mxu0 0
    %102 = vmatprep.subr.bf16.mxu0 0
    %103 = vmatpush1.bf16.msra.mxu0 0
    %104 = vmatprep.mubr.bf16.mxu0 0
    %105 = vmatmul.mubr.bf16.gmra.mrb[0].mxu0 %v70
    %v106 = vpop.f32.mrb[0].mxu0
    %v107 = vadd.f32 %v54, %v106
    %v108 = vpop.f32.mrb[0].mxu0
    %v109 = vpop.f32.mrb[0].mxu0
    %v110 = vpop.f32.mrb[0].mxu0
    %111 = vdwg.mxu0
    %v112 = vmax.f32 %v107, 0.0
    %v113 = vld [vmem:[%s4] sm:$0x1]
    %v115 = vlaneseq
    %v116 = vshrl.u32 %v115, 7
    %v117 = vsub.s32 0, %v116
    %v118 = vrot.slane %v113, %v117
    %v120 = vmul.f32 %v112, %v118
    %vm121 = vcmask 1041408
    %v122 = vsel %vm121, %v120, 0.0
    %123 = vadd.xlane.f32.xlu0 %v122
    %v124 = vpop.xlane.xlu0 %123
    %s125 = sld [smem:[#allocation2]]
    %v126 = vstv %s125
    %v127 = vadd.f32 %v124, %v126
    %v128 = vsub.f32 0.0, %v127
    %v129 = vmul.f32 %v128, 1.442695
    %v130 = vpow.pop %v129
    %v131 = vadd.f32 %v130, 1.0
    %v132 = vrcp.pop %v131
    %v133 = vmul.f32 1.0, %v132
    %vm134 = vcmask 1024
    %135 = vst.msk [vmem:[%s6] sm:$0x3] %vm134, %v133
    // Predicated region
    $region30: #{tpu_custom_call.1} parent=1 // pred_check
      _
    $region31: #{tpu_custom_call.1} parent=1 // pred_check_branch
      %137 = sbr.rel (0) target = $region33
    $region32: #{tpu_custom_call.1} parent=1 // pred_region
      _
    $region33: #{tpu_custom_call.1} parent=1 // pred_fallthru
      _
    // Predicated region
    $region34: #{tpu_custom_call.1} parent=1 // pred_check
      _
    $region35: #{tpu_custom_call.1} parent=1 // pred_check_branch
      %139 = sbr.rel (0) target = $region37
    $region36: #{tpu_custom_call.1} parent=1 // pred_region
      _
    $region37: #{tpu_custom_call.1} parent=1 // pred_fallthru
      _
    %140 = vsyncpa [#allocation4], 1

// kernel: tpu_custom_call.1
$region0: #{tpu_custom_call.1}
  #allocation0 [shape = 'u32[]', space=smem, size = 0x4, offset = 0x4, fixed_abs, tag = 'smem constant byte address 0x4 - core index']
  #allocation1 [shape = 'u32[144,128]{1,0:T(1,128)}', space=vmem, size = 0x12000, scoped, tag = 'internal scratch']
  #allocation2 [shape = 'f32[1,1]{1,0:T(1,128)S(6)}', space=smem, size = 0x200, scoped, tag = 'scoped memory for tpu_custom_call.1']
  %s0 = inlined_call_operand.vmem [shape: bf16[2,32], index: 0, kind: input, shape index: {}]
  %s1 = inlined_call_operand.vmem [shape: bf16[2,32], index: 1, kind: input, shape index: {}]
  %s2 = inlined_call_operand.hbm [shape: bf16[32,128], index: 2, kind: input, shape index: {}]
  %s3 = inlined_call_operand.vmem [shape: f32[1,128], index: 3, kind: input, shape index: {}]
  %s4 = inlined_call_operand.vmem [shape: f32[1,128], index: 4, kind: input, shape index: {}]
  %s5 = inlined_call_operand.<no memory space> [shape: f32[1,1], index: 5, kind: input, shape index: {}]
  %s6 = inlined_call_operand.vmem [shape: f32[2,1], index: 6, kind: output, shape index: {}]
  %s7 = sld [smem:[#allocation0]]
  $region38: #{tpu_custom_call.1} parent=0
    _
  %s9 = ssub.s32 1, %s7
  %s10 = scalar_select 0, %s9, %s7
  %11 = sst [smem:[#allocation2]] %s5
  $region1: #{tpu_custom_call.1} parent=0
    #allocation3 [shape = 'u8[8192]{0}', space=vmem, size = 0x2000, scoped, tag = 'input window, operand 2, single buffered']
    #allocation4 [shape = 's32[1]{0}', space=sflag, size = 0x4, scoped, tag = 'scoped memory for tpu_custom_call.1']
    %12 = vsyncpa [#allocation4], 0
    // Predicated region
    $region2: #{tpu_custom_call.1} parent=1 // pred_check
      _
    $region3: #{tpu_custom_call.1} parent=1 // pred_check_branch
      %14 = sbr.rel (0) target = $region5
    $region4: #{tpu_custom_call.1} parent=1 // pred_region
      _
    $region5: #{tpu_custom_call.1} parent=1 // pred_fallthru
      _
    // Predicated region
    $region6: #{tpu_custom_call.1} parent=1 // pred_check
      _
    $region7: #{tpu_custom_call.1} parent=1 // pred_check_branch
      %16 = sbr.rel (0) target = $region9
    $region8: #{tpu_custom_call.1} parent=1 // pred_region
      _
    $region9: #{tpu_custom_call.1} parent=1 // pred_fallthru
      _
    // Predicated region
    $region10: #{tpu_custom_call.1} parent=1 // pred_check
      _
    $region11: #{tpu_custom_call.1} parent=1 // pred_check_branch
      %18 = sbr.rel (0) target = $region13
    $region12: #{tpu_custom_call.1} parent=1 // pred_region
      %s20 = ssub.s32 256, 256
      %21 = vsyncadd [#allocation4], %s20
      %s22 = sshll.u32 [#allocation3], 4
      %s23 = int_to_ptr.vmem [resolvable:$true] %s22
      %28 = dma.hbm_to_vmem [thread:$0]  %s2, 256, %s23, [#allocation4], 64, 64, 4
    $region13: #{tpu_custom_call.1} parent=1 // pred_fallthru
      _
    // Predicated region
    $region14: #{tpu_custom_call.1} parent=1 // pred_check
      _
    $region15: #{tpu_custom_call.1} parent=1 // pred_check_branch
      %30 = sbr.rel (0) target = $region17
    $region16: #{tpu_custom_call.1} parent=1 // pred_region
      _
    $region17: #{tpu_custom_call.1} parent=1 // pred_fallthru
      _
    // Predicated region
    $region18: #{tpu_custom_call.1} parent=1 // pred_check
      _
    $region19: #{tpu_custom_call.1} parent=1 // pred_check_branch
      %32 = sbr.rel (0) target = $region21
    $region20: #{tpu_custom_call.1} parent=1 // pred_region
      _
    $region21: #{tpu_custom_call.1} parent=1 // pred_fallthru
      _
    // Predicated region
    $region22: #{tpu_custom_call.1} parent=1 // pred_check
      _
    $region23: #{tpu_custom_call.1} parent=1 // pred_check_branch
      %34 = sbr.rel (0) target = $region25
    $region24: #{tpu_custom_call.1} parent=1 // pred_region
      _
    $region25: #{tpu_custom_call.1} parent=1 // pred_fallthru
      _
    // Predicated region
    $region26: #{tpu_custom_call.1} parent=1 // pred_check
      _
    $region27: #{tpu_custom_call.1} parent=1 // pred_check_branch
      %36 = sbr.rel (0) target = $region29
    $region28: #{tpu_custom_call.1} parent=1 // pred_region
      %37 = dma.done [#allocation4], 256
    $region29: #{tpu_custom_call.1} parent=1 // pred_fallthru
      _
    %v39 = vld [vmem:[%s0] sm:$0x1]
    %v40 = vunpack.c.l.bf16 %v39
    %v41 = vld [vmem:[%s1] sm:$0x1]
    %v42 = vunpack.c.l.bf16 %v41
    %v43 = vmul.f32 %v40, %v42
    %v44 = vpack.c.bf16 %v43, %v43
    %v45 = vld [vmem:[#allocation3] sm:$0xf]
    %v46 = vld [vmem:[#allocation3 + $0x4] sm:$0xf]
    %v47 = vld [vmem:[#allocation3 + $0x8] sm:$0xf]
    %v48 = vld [vmem:[#allocation3 + $0xc] sm:$0xf]
    %v49 = vld [vmem:[%s3] sm:$0x1]
    %v51 = vlaneseq
    %v52 = vshrl.u32 %v51, 7
    %v53 = vsub.s32 0, %v52
    %v54 = vrot.slane %v49, %v53
    %v60 = vunpack.c.l.b16 %v45
    %v61 = vunpack.c.l.b16 %v46
    %v62 = vunpack.c.l.b16 %v47
    %v63 = vunpack.c.l.b16 %v48
    %v64 = vpack.c.b16 %v61, %v60
    %v65 = vpack.c.b16 %v63, %v62
    %vm68 = vcmask 261120
    %v70 = vsel %vm68, %v44, 0
    %72 = vmatprep.subr.bf16.mxu0 0
    %73 = vmatpush1.bf16.msra.mxu0 %v64
    %74 = vmatprep.subr.bf16.mxu0 0
    %75 = vmatpush1.bf16.msra.mxu0 %v65
    %76 = vmatprep.subr.bf16.mxu0 0
    %77 = vmatpush1.bf16.msra.mxu0 0
    %78 = vmatprep.subr.bf16.mxu0 0
    %79 = vmatpush1.bf16.msra.mxu0 0
    %80 = vmatprep.subr.bf16.mxu0 0
    %81 = vmatpush1.bf16.msra.mxu0 0
    %82 = vmatprep.subr.bf16.mxu0 0
    %83 = vmatpush1.bf16.msra.mxu0 0
    %84 = vmatprep.subr.bf16.mxu0 0
    %85 = vmatpush1.bf16.msra.mxu0 0
    %86 = vmatprep.subr.bf16.mxu0 0
    %87 = vmatpush1.bf16.msra.mxu0 0
    %88 = vmatprep.subr.bf16.mxu0 0
    %89 = vmatpush1.bf16.msra.mxu0 0
    %90 = vmatprep.subr.bf16.mxu0 0
    %91 = vmatpush1.bf16.msra.mxu0 0
    %92 = vmatprep.subr.bf16.mxu0 0
    %93 = vmatpush1.bf16.msra.mxu0 0
    %94 = vmatprep.subr.bf16.mxu0 0
    %95 = vmatpush1.bf16.msra.mxu0 0
    %96 = vmatprep.subr.bf16.mxu0 0
    %97 = vmatpush1.bf16.msra.mxu0 0
    %98 = vmatprep.subr.bf16.mxu0 0
    %99 = vmatpush1.bf16.msra.mxu0 0
    %100 = vmatprep.subr.bf16.mxu0 0
    %101 = vmatpush1.bf16.msra.mxu0 0
    %102 = vmatprep.subr.bf16.mxu0 0
    %103 = vmatpush1.bf16.msra.mxu0 0
    %104 = vmatprep.mubr.bf16.mxu0 0
    %105 = vmatmul.mubr.bf16.gmra.mrb[0].mxu0 %v70
    %v106 = vpop.f32.mrb[0].mxu0
    %v107 = vadd.f32 %v54, %v106
    %v108 = vpop.f32.mrb[0].mxu0
    %v109 = vpop.f32.mrb[0].mxu0
    %v110 = vpop.f32.mrb[0].mxu0
    %111 = vdwg.mxu0
    %v112 = vmax.f32 %v107, 0.0
    %v113 = vld [vmem:[%s4] sm:$0x1]
    %v115 = vlaneseq
    %v116 = vshrl.u32 %v115, 7
    %v117 = vsub.s32 0, %v116
    %v118 = vrot.slane %v113, %v117
    %v120 = vmul.f32 %v112, %v118
    %vm121 = vcmask 1041408
    %v122 = vsel %vm121, %v120, 0.0
    %123 = vadd.xlane.f32.xlu0 %v122
    %v124 = vpop.xlane.xlu0 %123
    %s125 = sld [smem:[#allocation2]]
    %v126 = vstv %s125
    %v127 = vadd.f32 %v124, %v126
    %v128 = vsub.f32 0.0, %v127
    %v129 = vmul.f32 %v128, 1.442695
    %v130 = vpow.pop %v129
    %v131 = vadd.f32 %v130, 1.0
    %v132 = vrcp.pop %v131
    %v133 = vmul.f32 1.0, %v132
    %vm134 = vcmask 1024
    %135 = vst.msk [vmem:[%s6] sm:$0x3] %vm134, %v133
    // Predicated region
    $region30: #{tpu_custom_call.1} parent=1 // pred_check
      _
    $region31: #{tpu_custom_call.1} parent=1 // pred_check_branch
      %137 = sbr.rel (0) target = $region33
    $region32: #{tpu_custom_call.1} parent=1 // pred_region
      _
    $region33: #{tpu_custom_call.1} parent=1 // pred_fallthru
      _
    // Predicated region
    $region34: #{tpu_custom_call.1} parent=1 // pred_check
      _
    $region35: #{tpu_custom_call.1} parent=1 // pred_check_branch
      %139 = sbr.rel (0) target = $region37
    $region36: #{tpu_custom_call.1} parent=1 // pred_region
      _
    $region37: #{tpu_custom_call.1} parent=1 // pred_fallthru
      _
    %140 = vsyncpa [#allocation4], 1

</llo_original>
